<compile_context>
chip_gen: v7x
topology: tpu7x:2x2x1
jax: 0.10.0
libtpu: 0.0.40
codegen_flags: <defaults>
</compile_context>

<pallas_src>
import functools
import math

import jax
import jax.numpy as jnp
from jax.experimental import pallas as pl
from jax.experimental.pallas import tpu as pltpu


BN_EPS = 1e-5
_SQRT_HALF = 1.0 / math.sqrt(2.0)

# XLA/Eigen float32 erf rational approximation (what jax.scipy.special.erf uses
# for f32), written out so the kernel only needs mul/add/recip/clip.
_ERF_ALPHA = (-2.72614225801306e-10, 2.77068142495902e-08, -2.10102402082508e-06,
              -5.69250639462346e-05, -7.34990630326855e-04, -2.95459980854025e-03,
              -1.60960333262415e-02)
_ERF_BETA = (-1.45660718464996e-05, -2.13374055278905e-04, -1.68282697438203e-03,
             -7.37332916720468e-03, -1.42647390514189e-02)


def _erf_f32(x):
  x = jnp.clip(x, -4.0, 4.0)
  x2 = x * x
  num = _ERF_ALPHA[0]
  for c in _ERF_ALPHA[1:]:
    num = num * x2 + c
  num = num * x
  den = _ERF_BETA[0]
  for c in _ERF_BETA[1:]:
    den = den * x2 + c
  # divide -> EUP reciprocal (exact; den is strictly negative, never ~0).
  return num * pl.reciprocal(den, approx=False)


def _gelu_exact(x):
  # PyTorch nn.GELU() default (approximate='none'): 0.5*x*(1 + erf(x/sqrt(2)))
  return 0.5 * x * (1.0 + _erf_f32(x * _SQRT_HALF))


# -----------------------------------------------------------------------------
# Fused kernel: flatten(conv1x1+BN+GELU) + single-head modality attention.
# Layout: features on sublanes, (B*L) on the lane axis (lane-dense outputs).
# -----------------------------------------------------------------------------
def _fused_kernel(x_ref, w_ref, s_ref, o_ref, *, num_mod, d_aug, seq_len, batch):
  # x_ref : (B*L, D_tot+1) activations, last column = 1 (folds conv+BN bias)
  # w_ref : (2M, D_tot+1 + L+1) packed VMEM weights
  #           [:M , :D_tot+1] = folded block-diag conv*BN weight | bias column
  #           [:M , D_tot+1:] = k_proj_w | bk column
  #           [M: , D_tot+1:] = v_proj_w | bv column
  # s_ref : (2*M*M + 2*M,) SMEM scalars: [q_proj_w, bq, out_proj_w, out_proj_b]
  # o_ref : (2M, B*L) merged output: rows [0,M) = x_t, rows [M,2M) = attn_t
  M, D1, L, B = num_mod, d_aug, seq_len, batch
  QW, BQ, OW, OB = 0, M * M, M * M + M, 2 * M * M + M      # SMEM offsets

  w = w_ref[...]
  x = x_ref[...]

  # --- flatten: one MXU dot (contract last-last, no wrapper transpose) -------
  mods_t = _gelu_exact(
      jax.lax.dot_general(w[:M, :D1], x, (((1,), (1,)), ((), ())),
                          preferred_element_type=jnp.float32))      # (M, B*L)

  # --- Q projection (hoisted over batch): SMEM scalar * vector MACs ----------
  scale = 1.0 / math.sqrt(M)                    # single head -> head_dim == M
  mrow = [mods_t[m:m + 1, :] for m in range(M)]
  qrow = []
  for e in range(M):
    acc = s_ref[QW + e * M] * mrow[0]
    for m in range(1, M):
      acc = acc + s_ref[QW + e * M + m] * mrow[m]
    qrow.append((acc + s_ref[BQ + e]) * scale)  # (1, B*L) each, pre-scaled

  # --- K/V projections for ALL batch elements: 2 MXU dots total --------------
  # Stack per-batch slices on sublanes and append a ones column so the bk/bv
  # bias columns packed in w ride the same contraction.
  mods_stack = jnp.concatenate(
      [mods_t[:, b * L:(b + 1) * L] for b in range(B)], axis=0)     # (B*M, L)
  mods_aug = jnp.concatenate(
      [mods_stack, jnp.ones((B * M, 1), jnp.float32)], axis=1)      # (B*M, L+1)
  kw_aug = w[:M, D1:]                                               # (M, L+1)
  vw_aug = w[M:, D1:]                                               # (M, L+1)
  k_all = jax.lax.dot_general(mods_aug, kw_aug, (((1,), (1,)), ((), ())),
                              preferred_element_type=jnp.float32)   # (B*M, E)
  v_all = jax.lax.dot_general(vw_aug, mods_aug, (((1,), (1,)), ((), ())),
                              preferred_element_type=jnp.float32)   # (E, B*M)

  # --- per-batch attention: pure VPU/EUP (K == M contractions stay off MXU) --
  out_pieces, attn_pieces = [], []
  for b in range(B):                            # static unroll, B small here
    sl = slice(b * L, (b + 1) * L)
    k_b = k_all[b * M:(b + 1) * M, :]           # (S, E)
    v_b = v_all[:, b * M:(b + 1) * M]           # (E, S)

    # scores (S, L) = sum_e k_b[:, e] * q[e, :]
    s_b = k_b[:, 0:1] * qrow[0][:, sl]
    for e in range(1, M):
      s_b = s_b + k_b[:, e:e + 1] * qrow[e][:, sl]

    # softmax over modalities: explicit sublane-row max/sum (no axis-0 reduce)
    mx = s_b[0:1, :]
    for s in range(1, M):
      mx = jnp.maximum(mx, s_b[s:s + 1, :])
    p = jnp.exp(s_b - mx)
    den = p[0:1, :]
    for s in range(1, M):
      den = den + p[s:s + 1, :]
    attn_b = p * pl.reciprocal(den, approx=False)   # exact: keep 1e-5 tolerance

    # attn @ v  ->  (E, L)
    o_b = v_b[:, 0:1] * attn_b[0:1, :]
    for s in range(1, M):
      o_b = o_b + v_b[:, s:s + 1] * attn_b[s:s + 1, :]

    out_pieces.append(o_b)
    attn_pieces.append(attn_b)

  out_all = jnp.concatenate(out_pieces, axis=1)     # (E, B*L)
  attn_all = jnp.concatenate(attn_pieces, axis=1)   # (M, B*L)

  # --- output projection (hoisted over batch): SMEM scalar MACs --------------
  orow = [out_all[e:e + 1, :] for e in range(M)]
  xrows = []
  for f in range(M):
    acc = s_ref[OW + f * M] * orow[0]
    for e in range(1, M):
      acc = acc + s_ref[OW + f * M + e] * orow[e]
    xrows.append(acc + s_ref[OB + f])

  # single lane-dense store of the merged output
  o_ref[...] = jnp.concatenate(xrows + [attn_all], axis=0)


# -----------------------------------------------------------------------------
# Wrapper: parameter folding / packing in plain JAX (no activation transpose).
# -----------------------------------------------------------------------------
def modality_attention_forward(inputs, params, dim_modalities):
  M = len(inputs)
  B, L, _ = inputs[0].shape
  D = sum(dim_modalities)
  D1, L1, BL = D + 1, L + 1, B * L

  # Fold Conv1d(k=1) + BatchNorm1d (eval) into one block-diagonal affine.
  rows, beff = [], []
  off = 0
  for i in range(M):
    d = dim_modalities[i]
    alpha = params['bn_gamma'][i] * jax.lax.rsqrt(params['bn_var'][i] + BN_EPS)
    rows.append(jnp.pad(params['conv_w'][i] * alpha, (off, D - off - d)))
    beff.append((params['conv_b'][i] - params['bn_mean'][i]) * alpha
                + params['bn_beta'][i])
    off += d
  wbd_aug = jnp.concatenate([jnp.stack(rows), jnp.stack(beff)[:, None]], axis=1)

  bq, bk, bv = jnp.split(params['in_proj_b'], 3)
  kw_aug = jnp.concatenate([params['k_proj_w'], bk[:, None]], axis=1)   # (M, L+1)
  vw_aug = jnp.concatenate([params['v_proj_w'], bv[:, None]], axis=1)   # (M, L+1)

  # One packed VMEM weight slab (one DMA instead of many tiny ones).
  W = jnp.zeros((2 * M, D1 + L1), jnp.float32)
  W = W.at[:M, :D1].set(wbd_aug)
  W = W.at[:M, D1:].set(kw_aug)
  W = W.at[M:, D1:].set(vw_aug)

  # Activations stay position-major (no wrapper transpose); ones column folds
  # the conv+BN bias into the flatten matmul.
  x_cat = jnp.concatenate(inputs, axis=-1).reshape(BL, D)
  x_aug = jnp.concatenate([x_cat, jnp.ones((BL, 1), jnp.float32)], axis=1)

  # Small constant-weight projections + their biases ride in SMEM as scalars.
  scal = jnp.concatenate([params['q_proj_w'].reshape(-1), bq,
                          params['out_proj_w'].reshape(-1), params['out_proj_b']])

  kernel = functools.partial(_fused_kernel, num_mod=M, d_aug=D1,
                             seq_len=L, batch=B)

  out = pl.pallas_call(
      kernel,
      out_shape=jax.ShapeDtypeStruct((2 * M, BL), jnp.float32),
      in_specs=[
          pl.BlockSpec(memory_space=pltpu.MemorySpace.VMEM),   # activations
          pl.BlockSpec(memory_space=pltpu.MemorySpace.VMEM),   # packed weights
          pl.BlockSpec(memory_space=pltpu.MemorySpace.SMEM),   # packed scalars
      ],
      out_specs=pl.BlockSpec(memory_space=pltpu.MemorySpace.VMEM),
  )(x_aug, W, scal)

  x_t, attn_t = out[:M], out[M:]
  # x_t[f, b*L+l]    = x[l, b, f]    -> (L, B, M)  (PyTorch: tgt, batch, embed)
  # attn_t[s, b*L+l] = attn[b, l, s] -> (B, L, M)
  x = jnp.transpose(x_t.reshape(M, B, L), (2, 1, 0))
  attn = jnp.transpose(attn_t.reshape(M, B, L), (1, 2, 0))
  return x, attn


# -----------------------------------------------------------------------------
# Pure-JAX reference (mirrors the PyTorch eval-mode forward) for verification.
# -----------------------------------------------------------------------------
def reference_forward(inputs, params):
  M = len(inputs)
  mods = []
  for i, x in enumerate(inputs):
    y = jnp.einsum('bld,d->bl', x, params['conv_w'][i]) + params['conv_b'][i]
    y = ((y - params['bn_mean'][i]) / jnp.sqrt(params['bn_var'][i] + BN_EPS)
         * params['bn_gamma'][i] + params['bn_beta'][i])
    y = 0.5 * y * (1.0 + jax.scipy.special.erf(y * _SQRT_HALF))
    mods.append(y)
  mods = jnp.stack(mods)                            # (M, B, L)
  query = jnp.transpose(mods, (2, 1, 0))            # (L, B, M)
  bq, bk, bv = jnp.split(params['in_proj_b'], 3)
  q = jnp.einsum('lbm,em->lbe', query, params['q_proj_w']) + bq
  k = jnp.einsum('sbd,ed->sbe', mods, params['k_proj_w']) + bk
  v = jnp.einsum('sbd,ed->sbe', mods, params['v_proj_w']) + bv
  scale = 1.0 / math.sqrt(M)
  scores = jnp.einsum('lbe,sbe->bls', q * scale, k)
  attn = jax.nn.softmax(scores, axis=-1)
  out = jnp.einsum('bls,sbe->lbe', attn, v)
  x = jnp.einsum('lbe,fe->lbf', out, params['out_proj_w']) + params['out_proj_b']
  return x, attn


def init_params(key, num_modalities, dim_modalities, seq_length):
  M, L = num_modalities, seq_length
  ks = iter(jax.random.split(key, 6 * M + 6))
  p = {}
  p['conv_w'] = [0.3 * jax.random.normal(next(ks), (d,), jnp.float32) for d in dim_modalities]
  p['conv_b'] = [0.1 * jax.random.normal(next(ks), (), jnp.float32) for _ in range(M)]
  p['bn_gamma'] = [1.0 + 0.1 * jax.random.normal(next(ks), (), jnp.float32) for _ in range(M)]
  p['bn_beta'] = [0.1 * jax.random.normal(next(ks), (), jnp.float32) for _ in range(M)]
  p['bn_mean'] = [0.05 * jax.random.normal(next(ks), (), jnp.float32) for _ in range(M)]
  p['bn_var'] = [1.0 + 0.1 * jax.random.uniform(next(ks), (), jnp.float32) for _ in range(M)]
  p['q_proj_w'] = 0.3 * jax.random.normal(next(ks), (M, M), jnp.float32)
  p['k_proj_w'] = 0.3 * jax.random.normal(next(ks), (M, L), jnp.float32)
  p['v_proj_w'] = 0.3 * jax.random.normal(next(ks), (M, L), jnp.float32)
  p['in_proj_b'] = 0.1 * jax.random.normal(next(ks), (3 * M,), jnp.float32)
  p['out_proj_w'] = 0.3 * jax.random.normal(next(ks), (M, M), jnp.float32)
  p['out_proj_b'] = 0.1 * jax.random.normal(next(ks), (M,), jnp.float32)
  return p


if __name__ == "__main__":
  num_modalities = 3
  dim_modalities = [4, 6, 5]
  seq_length = 8
  batch = 2

  key = jax.random.PRNGKey(0)
  k_in, k_par = jax.random.split(key)
  in_keys = jax.random.split(k_in, num_modalities)
  # inputs[i]: (B, L, dim_i)  (channels-last; PyTorch's Conv1d path sees NCL)
  inputs = [jax.random.normal(in_keys[i], (batch, seq_length, dim_modalities[i]), jnp.float32)
            for i in range(num_modalities)]
  params = init_params(k_par, num_modalities, dim_modalities, seq_length)

  x, w = modality_attention_forward(inputs, params, dim_modalities)
  x = jax.block_until_ready(x)
  w = jax.block_until_ready(w)

  x_ref, w_ref = reference_forward(inputs, params)
  assert x.shape == (seq_length, batch, num_modalities), x.shape
  assert w.shape == (batch, seq_length, num_modalities), w.shape
  assert jnp.allclose(x, x_ref, atol=1e-5, rtol=1e-5), float(jnp.max(jnp.abs(x - x_ref)))
  assert jnp.allclose(w, w_ref, atol=1e-5, rtol=1e-5), float(jnp.max(jnp.abs(w - w_ref)))
  print("KERNEL_OK")
</pallas_src>

<mosaic_0001>
module attributes {stable_mosaic.version = 11 : i64} {
  func.func @_fused_kernel(%arg0: memref<16x16xf32, #tpu.memory_space<vmem>>, %arg1: memref<6x25xf32, #tpu.memory_space<vmem>>, %arg2: memref<24xf32, #tpu.memory_space<smem>>, %arg3: memref<6x16xf32, #tpu.memory_space<vmem>>) attributes {dimension_semantics = [], scalar_prefetch = 0 : i64, scratch_operands = 0 : i64, tpu.core_type = #tpu.core_type<tc>} {
    %c0 = arith.constant 0 : index
    %c0_0 = arith.constant 0 : index
    %0 = vector.load %arg1[%c0, %c0_0] : memref<6x25xf32, #tpu.memory_space<vmem>>, vector<6x25xf32>
    %c0_1 = arith.constant 0 : index
    %c0_2 = arith.constant 0 : index
    %1 = vector.load %arg0[%c0_1, %c0_2] : memref<16x16xf32, #tpu.memory_space<vmem>>, vector<16x16xf32>
    %2 = vector.extract_strided_slice %0 {offsets = [0, 0], sizes = [3, 16], strides = [1, 1]} : vector<6x25xf32> to vector<3x16xf32>
    %cst = arith.constant dense<0.000000e+00> : vector<3x16xf32>
    %3 = tpu.matmul %2, %1, %cst {dimension_numbers = #tpu.dot_dimension_numbers<[1], [1], [0], [0], [0, 0, 1, 0], [], []>} : vector<3x16xf32>, vector<16x16xf32>, vector<3x16xf32> -> vector<3x16xf32>
    %cst_3 = arith.constant 5.000000e-01 : f32
    %4 = vector.broadcast %cst_3 : f32 to vector<3x16xf32>
    %5 = arith.mulf %4, %3 : vector<3x16xf32>
    %cst_4 = arith.constant 0.707106769 : f32
    %6 = vector.broadcast %cst_4 : f32 to vector<3x16xf32>
    %7 = arith.mulf %3, %6 : vector<3x16xf32>
    %cst_5 = arith.constant -4.000000e+00 : f32
    %cst_6 = arith.constant 4.000000e+00 : f32
    %8 = vector.broadcast %cst_5 : f32 to vector<3x16xf32>
    %9 = arith.maximumf %8, %7 : vector<3x16xf32>
    %10 = vector.broadcast %cst_6 : f32 to vector<3x16xf32>
    %11 = arith.minimumf %10, %9 : vector<3x16xf32>
    %12 = arith.mulf %11, %11 : vector<3x16xf32>
    %cst_7 = arith.constant -2.72614237E-10 : f32
    %13 = vector.broadcast %cst_7 : f32 to vector<3x16xf32>
    %14 = arith.mulf %13, %12 : vector<3x16xf32>
    %cst_8 = arith.constant 2.77068146E-8 : f32
    %15 = vector.broadcast %cst_8 : f32 to vector<3x16xf32>
    %16 = arith.addf %14, %15 : vector<3x16xf32>
    %17 = arith.mulf %16, %12 : vector<3x16xf32>
    %cst_9 = arith.constant -2.10102394E-6 : f32
    %18 = vector.broadcast %cst_9 : f32 to vector<3x16xf32>
    %19 = arith.addf %17, %18 : vector<3x16xf32>
    %20 = arith.mulf %19, %12 : vector<3x16xf32>
    %cst_10 = arith.constant -5.69250624E-5 : f32
    %21 = vector.broadcast %cst_10 : f32 to vector<3x16xf32>
    %22 = arith.addf %20, %21 : vector<3x16xf32>
    %23 = arith.mulf %22, %12 : vector<3x16xf32>
    %cst_11 = arith.constant -7.34990637E-4 : f32
    %24 = vector.broadcast %cst_11 : f32 to vector<3x16xf32>
    %25 = arith.addf %23, %24 : vector<3x16xf32>
    %26 = arith.mulf %25, %12 : vector<3x16xf32>
    %cst_12 = arith.constant -2.954600e-03 : f32
    %27 = vector.broadcast %cst_12 : f32 to vector<3x16xf32>
    %28 = arith.addf %26, %27 : vector<3x16xf32>
    %29 = arith.mulf %28, %12 : vector<3x16xf32>
    %cst_13 = arith.constant -0.0160960332 : f32
    %30 = vector.broadcast %cst_13 : f32 to vector<3x16xf32>
    %31 = arith.addf %29, %30 : vector<3x16xf32>
    %32 = arith.mulf %31, %11 : vector<3x16xf32>
    %cst_14 = arith.constant -1.45660715E-5 : f32
    %33 = vector.broadcast %cst_14 : f32 to vector<3x16xf32>
    %34 = arith.mulf %33, %12 : vector<3x16xf32>
    %cst_15 = arith.constant -2.13374049E-4 : f32
    %35 = vector.broadcast %cst_15 : f32 to vector<3x16xf32>
    %36 = arith.addf %34, %35 : vector<3x16xf32>
    %37 = arith.mulf %36, %12 : vector<3x16xf32>
    %cst_16 = arith.constant -0.00168282702 : f32
    %38 = vector.broadcast %cst_16 : f32 to vector<3x16xf32>
    %39 = arith.addf %37, %38 : vector<3x16xf32>
    %40 = arith.mulf %39, %12 : vector<3x16xf32>
    %cst_17 = arith.constant -0.00737332925 : f32
    %41 = vector.broadcast %cst_17 : f32 to vector<3x16xf32>
    %42 = arith.addf %40, %41 : vector<3x16xf32>
    %43 = arith.mulf %42, %12 : vector<3x16xf32>
    %cst_18 = arith.constant -0.0142647391 : f32
    %44 = vector.broadcast %cst_18 : f32 to vector<3x16xf32>
    %45 = arith.addf %43, %44 : vector<3x16xf32>
    %46 = tpu.reciprocal %45 : vector<3x16xf32> -> vector<3x16xf32>
    %47 = arith.mulf %32, %46 : vector<3x16xf32>
    %cst_19 = arith.constant 1.000000e+00 : f32
    %48 = vector.broadcast %cst_19 : f32 to vector<3x16xf32>
    %49 = arith.addf %48, %47 : vector<3x16xf32>
    %50 = arith.mulf %5, %49 : vector<3x16xf32>
    %51 = vector.extract_strided_slice %50 {offsets = [0, 0], sizes = [1, 16], strides = [1, 1]} : vector<3x16xf32> to vector<1x16xf32>
    %52 = vector.extract_strided_slice %50 {offsets = [1, 0], sizes = [1, 16], strides = [1, 1]} : vector<3x16xf32> to vector<1x16xf32>
    %53 = vector.extract_strided_slice %50 {offsets = [2, 0], sizes = [1, 16], strides = [1, 1]} : vector<3x16xf32> to vector<1x16xf32>
    %c0_20 = arith.constant 0 : index
    %54 = memref.load %arg2[%c0_20] : memref<24xf32, #tpu.memory_space<smem>>
    %55 = vector.broadcast %54 : f32 to vector<1x16xf32>
    %56 = arith.mulf %55, %51 : vector<1x16xf32>
    %c1 = arith.constant 1 : index
    %57 = memref.load %arg2[%c1] : memref<24xf32, #tpu.memory_space<smem>>
    %58 = vector.broadcast %57 : f32 to vector<1x16xf32>
    %59 = arith.mulf %58, %52 : vector<1x16xf32>
    %60 = arith.addf %56, %59 : vector<1x16xf32>
    %c2 = arith.constant 2 : index
    %61 = memref.load %arg2[%c2] : memref<24xf32, #tpu.memory_space<smem>>
    %62 = vector.broadcast %61 : f32 to vector<1x16xf32>
    %63 = arith.mulf %62, %53 : vector<1x16xf32>
    %64 = arith.addf %60, %63 : vector<1x16xf32>
    %c9 = arith.constant 9 : index
    %65 = memref.load %arg2[%c9] : memref<24xf32, #tpu.memory_space<smem>>
    %66 = vector.broadcast %65 : f32 to vector<1x16xf32>
    %67 = arith.addf %64, %66 : vector<1x16xf32>
    %cst_21 = arith.constant 0.577350259 : f32
    %68 = vector.broadcast %cst_21 : f32 to vector<1x16xf32>
    %69 = arith.mulf %67, %68 : vector<1x16xf32>
    %c3 = arith.constant 3 : index
    %70 = memref.load %arg2[%c3] : memref<24xf32, #tpu.memory_space<smem>>
    %71 = vector.broadcast %70 : f32 to vector<1x16xf32>
    %72 = arith.mulf %71, %51 : vector<1x16xf32>
    %c4 = arith.constant 4 : index
    %73 = memref.load %arg2[%c4] : memref<24xf32, #tpu.memory_space<smem>>
    %74 = vector.broadcast %73 : f32 to vector<1x16xf32>
    %75 = arith.mulf %74, %52 : vector<1x16xf32>
    %76 = arith.addf %72, %75 : vector<1x16xf32>
    %c5 = arith.constant 5 : index
    %77 = memref.load %arg2[%c5] : memref<24xf32, #tpu.memory_space<smem>>
    %78 = vector.broadcast %77 : f32 to vector<1x16xf32>
    %79 = arith.mulf %78, %53 : vector<1x16xf32>
    %80 = arith.addf %76, %79 : vector<1x16xf32>
    %c10 = arith.constant 10 : index
    %81 = memref.load %arg2[%c10] : memref<24xf32, #tpu.memory_space<smem>>
    %82 = vector.broadcast %81 : f32 to vector<1x16xf32>
    %83 = arith.addf %80, %82 : vector<1x16xf32>
    %cst_22 = arith.constant 0.577350259 : f32
    %84 = vector.broadcast %cst_22 : f32 to vector<1x16xf32>
    %85 = arith.mulf %83, %84 : vector<1x16xf32>
    %c6 = arith.constant 6 : index
    %86 = memref.load %arg2[%c6] : memref<24xf32, #tpu.memory_space<smem>>
    %87 = vector.broadcast %86 : f32 to vector<1x16xf32>
    %88 = arith.mulf %87, %51 : vector<1x16xf32>
    %c7 = arith.constant 7 : index
    %89 = memref.load %arg2[%c7] : memref<24xf32, #tpu.memory_space<smem>>
    %90 = vector.broadcast %89 : f32 to vector<1x16xf32>
    %91 = arith.mulf %90, %52 : vector<1x16xf32>
    %92 = arith.addf %88, %91 : vector<1x16xf32>
    %c8 = arith.constant 8 : index
    %93 = memref.load %arg2[%c8] : memref<24xf32, #tpu.memory_space<smem>>
    %94 = vector.broadcast %93 : f32 to vector<1x16xf32>
    %95 = arith.mulf %94, %53 : vector<1x16xf32>
    %96 = arith.addf %92, %95 : vector<1x16xf32>
    %c11 = arith.constant 11 : index
    %97 = memref.load %arg2[%c11] : memref<24xf32, #tpu.memory_space<smem>>
    %98 = vector.broadcast %97 : f32 to vector<1x16xf32>
    %99 = arith.addf %96, %98 : vector<1x16xf32>
    %cst_23 = arith.constant 0.577350259 : f32
    %100 = vector.broadcast %cst_23 : f32 to vector<1x16xf32>
    %101 = arith.mulf %99, %100 : vector<1x16xf32>
    %102 = vector.extract_strided_slice %50 {offsets = [0, 0], sizes = [3, 8], strides = [1, 1]} : vector<3x16xf32> to vector<3x8xf32>
    %103 = vector.extract_strided_slice %50 {offsets = [0, 8], sizes = [3, 8], strides = [1, 1]} : vector<3x16xf32> to vector<3x8xf32>
    %104 = tpu.concatenate %102, %103 in 0 : vector<3x8xf32>, vector<3x8xf32> -> vector<6x8xf32>
    %cst_24 = arith.constant 1.000000e+00 : f32
    %105 = vector.broadcast %cst_24 : f32 to vector<6x1xf32>
    %106 = tpu.concatenate %104, %105 in 1 : vector<6x8xf32>, vector<6x1xf32> -> vector<6x9xf32>
    %107 = vector.extract_strided_slice %0 {offsets = [0, 16], sizes = [3, 9], strides = [1, 1]} : vector<6x25xf32> to vector<3x9xf32>
    %108 = vector.extract_strided_slice %0 {offsets = [3, 16], sizes = [3, 9], strides = [1, 1]} : vector<6x25xf32> to vector<3x9xf32>
    %cst_25 = arith.constant dense<0.000000e+00> : vector<6x3xf32>
    %109 = tpu.matmul %106, %107, %cst_25 {dimension_numbers = #tpu.dot_dimension_numbers<[1], [1], [0], [0], [0, 0, 1, 0], [], []>} : vector<6x9xf32>, vector<3x9xf32>, vector<6x3xf32> -> vector<6x3xf32>
    %cst_26 = arith.constant dense<0.000000e+00> : vector<3x6xf32>
    %110 = tpu.matmul %108, %106, %cst_26 {dimension_numbers = #tpu.dot_dimension_numbers<[1], [1], [0], [0], [0, 0, 1, 0], [], []>} : vector<3x9xf32>, vector<6x9xf32>, vector<3x6xf32> -> vector<3x6xf32>
    %111 = vector.extract_strided_slice %109 {offsets = [0, 0], sizes = [3, 3], strides = [1, 1]} : vector<6x3xf32> to vector<3x3xf32>
    %112 = vector.extract_strided_slice %110 {offsets = [0, 0], sizes = [3, 3], strides = [1, 1]} : vector<3x6xf32> to vector<3x3xf32>
    %113 = vector.extract_strided_slice %111 {offsets = [0, 0], sizes = [3, 1], strides = [1, 1]} : vector<3x3xf32> to vector<3x1xf32>
    %114 = vector.extract_strided_slice %69 {offsets = [0, 0], sizes = [1, 8], strides = [1, 1]} : vector<1x16xf32> to vector<1x8xf32>
    %115 = vector.broadcast %113 : vector<3x1xf32> to vector<3x8xf32>
    %116 = vector.broadcast %114 : vector<1x8xf32> to vector<3x8xf32>
    %117 = arith.mulf %115, %116 : vector<3x8xf32>
    %118 = vector.extract_strided_slice %111 {offsets = [0, 1], sizes = [3, 1], strides = [1, 1]} : vector<3x3xf32> to vector<3x1xf32>
    %119 = vector.extract_strided_slice %85 {offsets = [0, 0], sizes = [1, 8], strides = [1, 1]} : vector<1x16xf32> to vector<1x8xf32>
    %120 = vector.broadcast %118 : vector<3x1xf32> to vector<3x8xf32>
    %121 = vector.broadcast %119 : vector<1x8xf32> to vector<3x8xf32>
    %122 = arith.mulf %120, %121 : vector<3x8xf32>
    %123 = arith.addf %117, %122 : vector<3x8xf32>
    %124 = vector.extract_strided_slice %111 {offsets = [0, 2], sizes = [3, 1], strides = [1, 1]} : vector<3x3xf32> to vector<3x1xf32>
    %125 = vector.extract_strided_slice %101 {offsets = [0, 0], sizes = [1, 8], strides = [1, 1]} : vector<1x16xf32> to vector<1x8xf32>
    %126 = vector.broadcast %124 : vector<3x1xf32> to vector<3x8xf32>
    %127 = vector.broadcast %125 : vector<1x8xf32> to vector<3x8xf32>
    %128 = arith.mulf %126, %127 : vector<3x8xf32>
    %129 = arith.addf %123, %128 : vector<3x8xf32>
    %130 = vector.extract_strided_slice %129 {offsets = [0, 0], sizes = [1, 8], strides = [1, 1]} : vector<3x8xf32> to vector<1x8xf32>
    %131 = vector.extract_strided_slice %129 {offsets = [1, 0], sizes = [1, 8], strides = [1, 1]} : vector<3x8xf32> to vector<1x8xf32>
    %132 = arith.maximumf %130, %131 : vector<1x8xf32>
    %133 = vector.extract_strided_slice %129 {offsets = [2, 0], sizes = [1, 8], strides = [1, 1]} : vector<3x8xf32> to vector<1x8xf32>
    %134 = arith.maximumf %132, %133 : vector<1x8xf32>
    %135 = vector.broadcast %134 : vector<1x8xf32> to vector<3x8xf32>
    %136 = arith.subf %129, %135 : vector<3x8xf32>
    %137 = math.exp %136 : vector<3x8xf32>
    %138 = vector.extract_strided_slice %137 {offsets = [0, 0], sizes = [1, 8], strides = [1, 1]} : vector<3x8xf32> to vector<1x8xf32>
    %139 = vector.extract_strided_slice %137 {offsets = [1, 0], sizes = [1, 8], strides = [1, 1]} : vector<3x8xf32> to vector<1x8xf32>
    %140 = arith.addf %138, %139 : vector<1x8xf32>
    %141 = vector.extract_strided_slice %137 {offsets = [2, 0], sizes = [1, 8], strides = [1, 1]} : vector<3x8xf32> to vector<1x8xf32>
    %142 = arith.addf %140, %141 : vector<1x8xf32>
    %143 = tpu.reciprocal %142 : vector<1x8xf32> -> vector<1x8xf32>
    %144 = vector.broadcast %143 : vector<1x8xf32> to vector<3x8xf32>
    %145 = arith.mulf %137, %144 : vector<3x8xf32>
    %146 = vector.extract_strided_slice %112 {offsets = [0, 0], sizes = [3, 1], strides = [1, 1]} : vector<3x3xf32> to vector<3x1xf32>
    %147 = vector.extract_strided_slice %145 {offsets = [0, 0], sizes = [1, 8], strides = [1, 1]} : vector<3x8xf32> to vector<1x8xf32>
    %148 = vector.broadcast %146 : vector<3x1xf32> to vector<3x8xf32>
    %149 = vector.broadcast %147 : vector<1x8xf32> to vector<3x8xf32>
    %150 = arith.mulf %148, %149 : vector<3x8xf32>
    %151 = vector.extract_strided_slice %112 {offsets = [0, 1], sizes = [3, 1], strides = [1, 1]} : vector<3x3xf32> to vector<3x1xf32>
    %152 = vector.extract_strided_slice %145 {offsets = [1, 0], sizes = [1, 8], strides = [1, 1]} : vector<3x8xf32> to vector<1x8xf32>
    %153 = vector.broadcast %151 : vector<3x1xf32> to vector<3x8xf32>
    %154 = vector.broadcast %152 : vector<1x8xf32> to vector<3x8xf32>
    %155 = arith.mulf %153, %154 : vector<3x8xf32>
    %156 = arith.addf %150, %155 : vector<3x8xf32>
    %157 = vector.extract_strided_slice %112 {offsets = [0, 2], sizes = [3, 1], strides = [1, 1]} : vector<3x3xf32> to vector<3x1xf32>
    %158 = vector.extract_strided_slice %145 {offsets = [2, 0], sizes = [1, 8], strides = [1, 1]} : vector<3x8xf32> to vector<1x8xf32>
    %159 = vector.broadcast %157 : vector<3x1xf32> to vector<3x8xf32>
    %160 = vector.broadcast %158 : vector<1x8xf32> to vector<3x8xf32>
    %161 = arith.mulf %159, %160 : vector<3x8xf32>
    %162 = arith.addf %156, %161 : vector<3x8xf32>
    %163 = vector.extract_strided_slice %109 {offsets = [3, 0], sizes = [3, 3], strides = [1, 1]} : vector<6x3xf32> to vector<3x3xf32>
    %164 = vector.extract_strided_slice %110 {offsets = [0, 3], sizes = [3, 3], strides = [1, 1]} : vector<3x6xf32> to vector<3x3xf32>
    %165 = vector.extract_strided_slice %163 {offsets = [0, 0], sizes = [3, 1], strides = [1, 1]} : vector<3x3xf32> to vector<3x1xf32>
    %166 = vector.extract_strided_slice %69 {offsets = [0, 8], sizes = [1, 8], strides = [1, 1]} : vector<1x16xf32> to vector<1x8xf32>
    %167 = vector.broadcast %165 : vector<3x1xf32> to vector<3x8xf32>
    %168 = vector.broadcast %166 : vector<1x8xf32> to vector<3x8xf32>
    %169 = arith.mulf %167, %168 : vector<3x8xf32>
    %170 = vector.extract_strided_slice %163 {offsets = [0, 1], sizes = [3, 1], strides = [1, 1]} : vector<3x3xf32> to vector<3x1xf32>
    %171 = vector.extract_strided_slice %85 {offsets = [0, 8], sizes = [1, 8], strides = [1, 1]} : vector<1x16xf32> to vector<1x8xf32>
    %172 = vector.broadcast %170 : vector<3x1xf32> to vector<3x8xf32>
    %173 = vector.broadcast %171 : vector<1x8xf32> to vector<3x8xf32>
    %174 = arith.mulf %172, %173 : vector<3x8xf32>
    %175 = arith.addf %169, %174 : vector<3x8xf32>
    %176 = vector.extract_strided_slice %163 {offsets = [0, 2], sizes = [3, 1], strides = [1, 1]} : vector<3x3xf32> to vector<3x1xf32>
    %177 = vector.extract_strided_slice %101 {offsets = [0, 8], sizes = [1, 8], strides = [1, 1]} : vector<1x16xf32> to vector<1x8xf32>
    %178 = vector.broadcast %176 : vector<3x1xf32> to vector<3x8xf32>
    %179 = vector.broadcast %177 : vector<1x8xf32> to vector<3x8xf32>
    %180 = arith.mulf %178, %179 : vector<3x8xf32>
    %181 = arith.addf %175, %180 : vector<3x8xf32>
    %182 = vector.extract_strided_slice %181 {offsets = [0, 0], sizes = [1, 8], strides = [1, 1]} : vector<3x8xf32> to vector<1x8xf32>
    %183 = vector.extract_strided_slice %181 {offsets = [1, 0], sizes = [1, 8], strides = [1, 1]} : vector<3x8xf32> to vector<1x8xf32>
    %184 = arith.maximumf %182, %183 : vector<1x8xf32>
    %185 = vector.extract_strided_slice %181 {offsets = [2, 0], sizes = [1, 8], strides = [1, 1]} : vector<3x8xf32> to vector<1x8xf32>
    %186 = arith.maximumf %184, %185 : vector<1x8xf32>
    %187 = vector.broadcast %186 : vector<1x8xf32> to vector<3x8xf32>
    %188 = arith.subf %181, %187 : vector<3x8xf32>
    %189 = math.exp %188 : vector<3x8xf32>
    %190 = vector.extract_strided_slice %189 {offsets = [0, 0], sizes = [1, 8], strides = [1, 1]} : vector<3x8xf32> to vector<1x8xf32>
    %191 = vector.extract_strided_slice %189 {offsets = [1, 0], sizes = [1, 8], strides = [1, 1]} : vector<3x8xf32> to vector<1x8xf32>
    %192 = arith.addf %190, %191 : vector<1x8xf32>
    %193 = vector.extract_strided_slice %189 {offsets = [2, 0], sizes = [1, 8], strides = [1, 1]} : vector<3x8xf32> to vector<1x8xf32>
    %194 = arith.addf %192, %193 : vector<1x8xf32>
    %195 = tpu.reciprocal %194 : vector<1x8xf32> -> vector<1x8xf32>
    %196 = vector.broadcast %195 : vector<1x8xf32> to vector<3x8xf32>
    %197 = arith.mulf %189, %196 : vector<3x8xf32>
    %198 = vector.extract_strided_slice %164 {offsets = [0, 0], sizes = [3, 1], strides = [1, 1]} : vector<3x3xf32> to vector<3x1xf32>
    %199 = vector.extract_strided_slice %197 {offsets = [0, 0], sizes = [1, 8], strides = [1, 1]} : vector<3x8xf32> to vector<1x8xf32>
    %200 = vector.broadcast %198 : vector<3x1xf32> to vector<3x8xf32>
    %201 = vector.broadcast %199 : vector<1x8xf32> to vector<3x8xf32>
    %202 = arith.mulf %200, %201 : vector<3x8xf32>
    %203 = vector.extract_strided_slice %164 {offsets = [0, 1], sizes = [3, 1], strides = [1, 1]} : vector<3x3xf32> to vector<3x1xf32>
    %204 = vector.extract_strided_slice %197 {offsets = [1, 0], sizes = [1, 8], strides = [1, 1]} : vector<3x8xf32> to vector<1x8xf32>
    %205 = vector.broadcast %203 : vector<3x1xf32> to vector<3x8xf32>
    %206 = vector.broadcast %204 : vector<1x8xf32> to vector<3x8xf32>
    %207 = arith.mulf %205, %206 : vector<3x8xf32>
    %208 = arith.addf %202, %207 : vector<3x8xf32>
    %209 = vector.extract_strided_slice %164 {offsets = [0, 2], sizes = [3, 1], strides = [1, 1]} : vector<3x3xf32> to vector<3x1xf32>
    %210 = vector.extract_strided_slice %197 {offsets = [2, 0], sizes = [1, 8], strides = [1, 1]} : vector<3x8xf32> to vector<1x8xf32>
    %211 = vector.broadcast %209 : vector<3x1xf32> to vector<3x8xf32>
    %212 = vector.broadcast %210 : vector<1x8xf32> to vector<3x8xf32>
    %213 = arith.mulf %211, %212 : vector<3x8xf32>
    %214 = arith.addf %208, %213 : vector<3x8xf32>
    %215 = tpu.concatenate %162, %214 in 1 : vector<3x8xf32>, vector<3x8xf32> -> vector<3x16xf32>
    %216 = tpu.concatenate %145, %197 in 1 : vector<3x8xf32>, vector<3x8xf32> -> vector<3x16xf32>
    %217 = vector.extract_strided_slice %215 {offsets = [0, 0], sizes = [1, 16], strides = [1, 1]} : vector<3x16xf32> to vector<1x16xf32>
    %218 = vector.extract_strided_slice %215 {offsets = [1, 0], sizes = [1, 16], strides = [1, 1]} : vector<3x16xf32> to vector<1x16xf32>
    %219 = vector.extract_strided_slice %215 {offsets = [2, 0], sizes = [1, 16], strides = [1, 1]} : vector<3x16xf32> to vector<1x16xf32>
    %c12 = arith.constant 12 : index
    %220 = memref.load %arg2[%c12] : memref<24xf32, #tpu.memory_space<smem>>
    %221 = vector.broadcast %220 : f32 to vector<1x16xf32>
    %222 = arith.mulf %221, %217 : vector<1x16xf32>
    %c13 = arith.constant 13 : index
    %223 = memref.load %arg2[%c13] : memref<24xf32, #tpu.memory_space<smem>>
    %224 = vector.broadcast %223 : f32 to vector<1x16xf32>
    %225 = arith.mulf %224, %218 : vector<1x16xf32>
    %226 = arith.addf %222, %225 : vector<1x16xf32>
    %c14 = arith.constant 14 : index
    %227 = memref.load %arg2[%c14] : memref<24xf32, #tpu.memory_space<smem>>
    %228 = vector.broadcast %227 : f32 to vector<1x16xf32>
    %229 = arith.mulf %228, %219 : vector<1x16xf32>
    %230 = arith.addf %226, %229 : vector<1x16xf32>
    %c21 = arith.constant 21 : index
    %231 = memref.load %arg2[%c21] : memref<24xf32, #tpu.memory_space<smem>>
    %232 = vector.broadcast %231 : f32 to vector<1x16xf32>
    %233 = arith.addf %230, %232 : vector<1x16xf32>
    %c15 = arith.constant 15 : index
    %234 = memref.load %arg2[%c15] : memref<24xf32, #tpu.memory_space<smem>>
    %235 = vector.broadcast %234 : f32 to vector<1x16xf32>
    %236 = arith.mulf %235, %217 : vector<1x16xf32>
    %c16 = arith.constant 16 : index
    %237 = memref.load %arg2[%c16] : memref<24xf32, #tpu.memory_space<smem>>
    %238 = vector.broadcast %237 : f32 to vector<1x16xf32>
    %239 = arith.mulf %238, %218 : vector<1x16xf32>
    %240 = arith.addf %236, %239 : vector<1x16xf32>
    %c17 = arith.constant 17 : index
    %241 = memref.load %arg2[%c17] : memref<24xf32, #tpu.memory_space<smem>>
    %242 = vector.broadcast %241 : f32 to vector<1x16xf32>
    %243 = arith.mulf %242, %219 : vector<1x16xf32>
    %244 = arith.addf %240, %243 : vector<1x16xf32>
    %c22 = arith.constant 22 : index
    %245 = memref.load %arg2[%c22] : memref<24xf32, #tpu.memory_space<smem>>
    %246 = vector.broadcast %245 : f32 to vector<1x16xf32>
    %247 = arith.addf %244, %246 : vector<1x16xf32>
    %c18 = arith.constant 18 : index
    %248 = memref.load %arg2[%c18] : memref<24xf32, #tpu.memory_space<smem>>
    %249 = vector.broadcast %248 : f32 to vector<1x16xf32>
    %250 = arith.mulf %249, %217 : vector<1x16xf32>
    %c19 = arith.constant 19 : index
    %251 = memref.load %arg2[%c19] : memref<24xf32, #tpu.memory_space<smem>>
    %252 = vector.broadcast %251 : f32 to vector<1x16xf32>
    %253 = arith.mulf %252, %218 : vector<1x16xf32>
    %254 = arith.addf %250, %253 : vector<1x16xf32>
    %c20 = arith.constant 20 : index
    %255 = memref.load %arg2[%c20] : memref<24xf32, #tpu.memory_space<smem>>
    %256 = vector.broadcast %255 : f32 to vector<1x16xf32>
    %257 = arith.mulf %256, %219 : vector<1x16xf32>
    %258 = arith.addf %254, %257 : vector<1x16xf32>
    %c23 = arith.constant 23 : index
    %259 = memref.load %arg2[%c23] : memref<24xf32, #tpu.memory_space<smem>>
    %260 = vector.broadcast %259 : f32 to vector<1x16xf32>
    %261 = arith.addf %258, %260 : vector<1x16xf32>
    %262 = tpu.concatenate %233, %247, %261, %216 in 0 : vector<1x16xf32>, vector<1x16xf32>, vector<1x16xf32>, vector<3x16xf32> -> vector<6x16xf32>
    %c0_27 = arith.constant 0 : index
    %c0_28 = arith.constant 0 : index
    %263 = vector.load %arg3[%c0_27, %c0_28] : memref<6x16xf32, #tpu.memory_space<vmem>>, vector<6x16xf32>
    tpu.vector_store %arg3[%c0_27, %c0_28], %262 {strides = array<i32>} : memref<6x16xf32, #tpu.memory_space<vmem>>, vector<6x16xf32>,
    return
  }
}

</mosaic_0001>

<llo_original>
// kernel: tpu_custom_call.1
$region0: #{tpu_custom_call.1}
  #allocation0 [shape = 'u32[]', space=smem, size = 0x4, offset = 0x4, fixed_abs, tag = 'smem constant byte address 0x4 - core index']
  #allocation1 [shape = 'u32[144,128]{1,0:T(1,128)}', space=vmem, size = 0x12000, scoped, tag = 'internal scratch']
  %s0 = inlined_call_operand.hbm [shape: f32[16,16], index: 0, kind: input, shape index: {}]
  %s1 = inlined_call_operand.hbm [shape: f32[6,25], index: 1, kind: input, shape index: {}]
  %s2 = inlined_call_operand.vmem [shape: f32[24], index: 2, kind: input, shape index: {}]
  %s3 = inlined_call_operand.hbm [shape: f32[6,16], index: 3, kind: output, shape index: {}]
  %s4 = sld [smem:[#allocation0]]
  $region34: #{tpu_custom_call.1} parent=0
    _
  %s6 = ssub.s32 1, %s4
  %s7 = scalar_select 0, %s6, %s4
  $region1: #{tpu_custom_call.1} parent=0
    #allocation2 [shape = 'u8[8192]{0}', space=vmem, size = 0x2000, scoped, tag = 'input window, operand 0, single buffered']
    #allocation3 [shape = 's32[1]{0}', space=sflag, size = 0x4, scoped, tag = 'scoped memory for tpu_custom_call.1']
    #allocation4 [shape = 's32[1]{0}', space=sflag, size = 0x4, scoped, tag = 'scoped memory for tpu_custom_call.1']
    #allocation5 [shape = 's32[1]{0}', space=sflag, size = 0x4, scoped, tag = 'scoped memory for tpu_custom_call.1']
    #allocation6 [shape = 'u8[4096]{0}', space=vmem, size = 0x1000, scoped, tag = 'input window, operand 1, single buffered']
    #allocation7 [shape = 's32[1]{0}', space=sflag, size = 0x4, scoped, tag = 'scoped memory for tpu_custom_call.1']
    #allocation8 [shape = 'u8[512]{0}', space=smem, size = 0x200, scoped, tag = 'input window, operand 2, single buffered']
    #allocation9 [shape = 'u8[4096]{0}', space=vmem, size = 0x1000, scoped, tag = 'output window, operand 0, single buffered']
    %8 = vsyncpa [#allocation3], 0
    %9 = vsyncpa [#allocation7], 0
    %10 = vsyncpa [#allocation5], 0
    %11 = vsyncpa [#allocation4], 0
    // Predicated region
    $region2: #{tpu_custom_call.1} parent=1 // pred_check
      _
    $region3: #{tpu_custom_call.1} parent=1 // pred_check_branch
      %13 = sbr.rel (0) target = $region5
    $region4: #{tpu_custom_call.1} parent=1 // pred_region
      %s15 = ssub.s32 256, 256
      %16 = vsyncadd [#allocation3], %s15
      %s17 = sshll.u32 [#allocation2], 4
      %s18 = int_to_ptr.vmem [resolvable:$true] %s17
      %23 = dma.hbm_to_vmem [thread:$0]  %s0, 256, %s18, [#allocation3], 128, 128, 8
    $region5: #{tpu_custom_call.1} parent=1 // pred_fallthru
      _
    // Predicated region
    $region6: #{tpu_custom_call.1} parent=1 // pred_check
      _
    $region7: #{tpu_custom_call.1} parent=1 // pred_check_branch
      %25 = sbr.rel (0) target = $region9
    $region8: #{tpu_custom_call.1} parent=1 // pred_region
      %s27 = ssub.s32 128, 128
      %28 = vsyncadd [#allocation7], %s27
      %s30 = sshll.u32 [#allocation6], 4
      %s31 = int_to_ptr.vmem [resolvable:$true] %s30
      %33 = dma.hbm_to_vmem [thread:$0]  %s1, 128, %s31, [#allocation7]
    $region9: #{tpu_custom_call.1} parent=1 // pred_fallthru
      _
    // Predicated region
    $region10: #{tpu_custom_call.1} parent=1 // pred_check
      _
    $region11: #{tpu_custom_call.1} parent=1 // pred_check_branch
      %35 = sbr.rel (0) target = $region13
    $region12: #{tpu_custom_call.1} parent=1 // pred_region
      %s37 = ssub.s32 16, 16
      %38 = vsyncadd [#allocation5], %s37
      %s40 = sshll.u32 %s2, 4
      %s41 = int_to_ptr.vmem [resolvable:$true] %s40
      %43 = dma.vmem_to_smem %s41, 16, [#allocation8], [#allocation5]
    $region13: #{tpu_custom_call.1} parent=1 // pred_fallthru
      _
    // Predicated region
    $region14: #{tpu_custom_call.1} parent=1 // pred_check
      _
    $region15: #{tpu_custom_call.1} parent=1 // pred_check_branch
      %45 = sbr.rel (0) target = $region17
    $region16: #{tpu_custom_call.1} parent=1 // pred_region
      %46 = dma.done [#allocation3], 256
    $region17: #{tpu_custom_call.1} parent=1 // pred_fallthru
      _
    // Predicated region
    $region18: #{tpu_custom_call.1} parent=1 // pred_check
      _
    $region19: #{tpu_custom_call.1} parent=1 // pred_check_branch
      %48 = sbr.rel (0) target = $region21
    $region20: #{tpu_custom_call.1} parent=1 // pred_region
      %49 = dma.done [#allocation7], 128
    $region21: #{tpu_custom_call.1} parent=1 // pred_fallthru
      _
    // Predicated region
    $region22: #{tpu_custom_call.1} parent=1 // pred_check
      _
    $region23: #{tpu_custom_call.1} parent=1 // pred_check_branch
      %51 = sbr.rel (0) target = $region25
    $region24: #{tpu_custom_call.1} parent=1 // pred_region
      %52 = dma.done [#allocation5], 16
    $region25: #{tpu_custom_call.1} parent=1 // pred_fallthru
      _
    %53 = sfence
    %v54 = vld [vmem:[#allocation6] sm:$0x3f]
    %v55 = vld [vmem:[#allocation2] sm:$0xff]
    %v56 = vld [vmem:[#allocation2 + $0x8] sm:$0xff]
    %vm57 = vcmask 130048
    %v59 = vsel %vm57, %v54, 0
    %v62 = vsel %vm57, %v55, 0
    %v65 = vsel %vm57, %v56, 0
    %67 = vmatprep.subr.mxu0 0.0
    %68 = vmatpush1.xpose.msra.mxu0 %v62
    %69 = vmatprep.subr.mxu0 0.0
    %70 = vmatpush1.xpose.msra.mxu0 %v65
    %71 = vmatprep.subr.mxu0 0.0
    %72 = vmatpush1.xpose.msra.mxu0 0.0
    %73 = vmatprep.subr.mxu0 0.0
    %74 = vmatpush1.xpose.msra.mxu0 0.0
    %75 = vmatprep.subr.mxu0 0.0
    %76 = vmatpush1.xpose.msra.mxu0 0.0
    %77 = vmatprep.subr.mxu0 0.0
    %78 = vmatpush1.xpose.msra.mxu0 0.0
    %79 = vmatprep.subr.mxu0 0.0
    %80 = vmatpush1.xpose.msra.mxu0 0.0
    %81 = vmatprep.subr.mxu0 0.0
    %82 = vmatpush1.xpose.msra.mxu0 0.0
    %83 = vmatprep.subr.mxu0 0.0
    %84 = vmatpush1.xpose.msra.mxu0 0.0
    %85 = vmatprep.subr.mxu0 0.0
    %86 = vmatpush1.xpose.msra.mxu0 0.0
    %87 = vmatprep.subr.mxu0 0.0
    %88 = vmatpush1.xpose.msra.mxu0 0.0
    %89 = vmatprep.subr.mxu0 0.0
    %90 = vmatpush1.xpose.msra.mxu0 0.0
    %91 = vmatprep.subr.mxu0 0.0
    %92 = vmatpush1.xpose.msra.mxu0 0.0
    %93 = vmatprep.subr.mxu0 0.0
    %94 = vmatpush1.xpose.msra.mxu0 0.0
    %95 = vmatprep.subr.mxu0 0.0
    %96 = vmatpush1.xpose.msra.mxu0 0.0
    %97 = vmatprep.subr.mxu0 0.0
    %98 = vmatpush1.xpose.msra.mxu0 0.0
    %99 = vmatprep.subr.mxu0 0.0
    %100 = vmatpush1.xpose.msra.mxu0 0.0
    %101 = vmatprep.subr.mxu0 0.0
    %102 = vmatpush1.xpose.msra.mxu0 0.0
    %103 = vmatprep.subr.mxu0 0.0
    %104 = vmatpush1.xpose.msra.mxu0 0.0
    %105 = vmatprep.subr.mxu0 0.0
    %106 = vmatpush1.xpose.msra.mxu0 0.0
    %107 = vmatprep.subr.mxu0 0.0
    %108 = vmatpush1.xpose.msra.mxu0 0.0
    %109 = vmatprep.subr.mxu0 0.0
    %110 = vmatpush1.xpose.msra.mxu0 0.0
    %111 = vmatprep.subr.mxu0 0.0
    %112 = vmatpush1.xpose.msra.mxu0 0.0
    %113 = vmatprep.subr.mxu0 0.0
    %114 = vmatpush1.xpose.msra.mxu0 0.0
    %115 = vmatprep.subr.mxu0 0.0
    %116 = vmatpush1.xpose.msra.mxu0 0.0
    %117 = vmatprep.subr.mxu0 0.0
    %118 = vmatpush1.xpose.msra.mxu0 0.0
    %119 = vmatprep.subr.mxu0 0.0
    %120 = vmatpush1.xpose.msra.mxu0 0.0
    %121 = vmatprep.subr.mxu0 0.0
    %122 = vmatpush1.xpose.msra.mxu0 0.0
    %123 = vmatprep.subr.mxu0 0.0
    %124 = vmatpush1.xpose.msra.mxu0 0.0
    %125 = vmatprep.subr.mxu0 0.0
    %126 = vmatpush1.xpose.msra.mxu0 0.0
    %127 = vmatprep.subr.mxu0 0.0
    %128 = vmatpush1.xpose.msra.mxu0 0.0
    %129 = vmatprep.subr.mxu0 0.0
    %130 = vmatpush1.xpose.msra.mxu0 0.0
    %131 = vmatprep.mubr.f32.mxu0 0.0
    %132 = vmatmul.mubr.f32.gmra.mrb[0].mxu0 %v59
    %v133 = vpop.f32.mrb[0].mxu0
    %v134 = vadd.f32 0.0, %v133
    %v135 = vpop.f32.mrb[0].mxu0
    %136 = vdwg.mxu0
    %v137 = vmul.f32 %v134, 0.5
    %v138 = vmul.f32 %v134, 0.70710677
    %v139 = vmax.f32 %v138, -4.0
    %v140 = vmin.f32 %v139, 4.0
    %v141 = vmul.f32 %v140, %v140
    %v142 = vmul.f32 %v141, -2.7261424e-10
    %v143 = vadd.f32 %v142, 2.7706815e-08
    %v144 = vmul.f32 %v143, %v141
    %v145 = vadd.f32 %v144, -2.101024e-06
    %v146 = vmul.f32 %v145, %v141
    %v147 = vadd.f32 %v146, -5.6925062e-05
    %v148 = vmul.f32 %v147, %v141
    %v149 = vadd.f32 %v148, -0.00073499064
    %v150 = vmul.f32 %v149, %v141
    %v151 = vadd.f32 %v150, -0.0029546
    %v152 = vmul.f32 %v151, %v141
    %v153 = vadd.f32 %v152, -0.016096033
    %v154 = vmul.f32 %v153, %v140
    %v155 = vmul.f32 %v141, -1.45660715e-05
    %v156 = vadd.f32 %v155, -0.00021337405
    %v157 = vmul.f32 %v156, %v141
    %v158 = vadd.f32 %v157, -0.001682827
    %v159 = vmul.f32 %v158, %v141
    %v160 = vadd.f32 %v159, -0.0073733293
    %v161 = vmul.f32 %v160, %v141
    %v162 = vadd.f32 %v161, -0.014264739
    %v163 = vrcp.pop %v162
    %v164 = vmul.f32 %v154, %v163
    %v165 = vadd.f32 %v164, 1.0
    %v166 = vmul.f32 %v137, %v165
    %s167 = sld [smem:[#allocation8]]
    %v168 = vstv %s167
    %v169 = vmul.f32 %v168, %v166
    %s170 = sld [smem:[#allocation8 + $0x1]]
    %v171 = vstv %s170
    %v172 = vmul.f32 %v171, %v166
    %v174 = vrot.slane %v172, 1
    %v176 = vadd.f32 %v169, %v174
    %s177 = sld [smem:[#allocation8 + $0x2]]
    %v178 = vstv %s177
    %v179 = vmul.f32 %v178, %v166
    %v181 = vrot.slane %v179, 2
    %v183 = vadd.f32 %v176, %v181
    %s184 = sld [smem:[#allocation8 + $0x9]]
    %v185 = vstv %s184
    %v186 = vadd.f32 %v183, %v185
    %v187 = vmul.f32 %v186, 0.57735026
    %s188 = sld [smem:[#allocation8 + $0x3]]
    %v189 = vstv %s188
    %v190 = vmul.f32 %v189, %v166
    %s191 = sld [smem:[#allocation8 + $0x4]]
    %v192 = vstv %s191
    %v193 = vmul.f32 %v192, %v166
    %v195 = vrot.slane %v193, 1
    %v197 = vadd.f32 %v190, %v195
    %s198 = sld [smem:[#allocation8 + $0x5]]
    %v199 = vstv %s198
    %v200 = vmul.f32 %v199, %v166
    %v202 = vrot.slane %v200, 2
    %v204 = vadd.f32 %v197, %v202
    %s205 = sld [smem:[#allocation8 + $0xa]]
    %v206 = vstv %s205
    %v207 = vadd.f32 %v204, %v206
    %v208 = vmul.f32 %v207, 0.57735026
    %s209 = sld [smem:[#allocation8 + $0x6]]
    %v210 = vstv %s209
    %v211 = vmul.f32 %v210, %v166
    %s212 = sld [smem:[#allocation8 + $0x7]]
    %v213 = vstv %s212
    %v214 = vmul.f32 %v213, %v166
    %v216 = vrot.slane %v214, 1
    %v218 = vadd.f32 %v211, %v216
    %s219 = sld [smem:[#allocation8 + $0x8]]
    %v220 = vstv %s219
    %v221 = vmul.f32 %v220, %v166
    %v223 = vrot.slane %v221, 2
    %v225 = vadd.f32 %v218, %v223
    %s226 = sld [smem:[#allocation8 + $0xb]]
    %v227 = vstv %s226
    %v228 = vadd.f32 %v225, %v227
    %v229 = vmul.f32 %v228, 0.57735026
    %v231 = vrot.slane %v166, 5
    %232 = vrot.lane.b32.xlu0 %v231, 120
    %v233 = vpop.permute.xlu0 %232
    %vm235 = vcmask 1042432
    %v236 = vsel %vm235, %v166, %v233
    %vm237 = vcmask 64512
    %v238 = vsel %vm237, %v236, 1.0
    %239 = vrot.lane.b32.xlu0 %v54, 112
    %v240 = vpop.permute.xlu0 %239
    %vm241 = vcmask 72704
    %v243 = vsel %vm241, %v238, 0
    %v245 = vsel %vm241, %v240, 0
    %247 = vmatprep.subr.mxu0 0.0
    %248 = vmatpush1.xpose.msra.mxu0 %v245
    %249 = vmatprep.subr.mxu0 0.0
    %250 = vmatpush1.xpose.msra.mxu0 0.0
    %251 = vmatprep.subr.mxu0 0.0
    %252 = vmatpush1.xpose.msra.mxu0 0.0
    %253 = vmatprep.subr.mxu0 0.0
    %254 = vmatpush1.xpose.msra.mxu0 0.0
    %255 = vmatprep.subr.mxu0 0.0
    %256 = vmatpush1.xpose.msra.mxu0 0.0
    %257 = vmatprep.subr.mxu0 0.0
    %258 = vmatpush1.xpose.msra.mxu0 0.0
    %259 = vmatprep.subr.mxu0 0.0
    %260 = vmatpush1.xpose.msra.mxu0 0.0
    %261 = vmatprep.subr.mxu0 0.0
    %262 = vmatpush1.xpose.msra.mxu0 0.0
    %263 = vmatprep.subr.mxu0 0.0
    %264 = vmatpush1.xpose.msra.mxu0 0.0
    %265 = vmatprep.subr.mxu0 0.0
    %266 = vmatpush1.xpose.msra.mxu0 0.0
    %267 = vmatprep.subr.mxu0 0.0
    %268 = vmatpush1.xpose.msra.mxu0 0.0
    %269 = vmatprep.subr.mxu0 0.0
    %270 = vmatpush1.xpose.msra.mxu0 0.0
    %271 = vmatprep.subr.mxu0 0.0
    %272 = vmatpush1.xpose.msra.mxu0 0.0
    %273 = vmatprep.subr.mxu0 0.0
    %274 = vmatpush1.xpose.msra.mxu0 0.0
    %275 = vmatprep.subr.mxu0 0.0
    %276 = vmatpush1.xpose.msra.mxu0 0.0
    %277 = vmatprep.subr.mxu0 0.0
    %278 = vmatpush1.xpose.msra.mxu0 0.0
    %279 = vmatprep.subr.mxu0 0.0
    %280 = vmatpush1.xpose.msra.mxu0 0.0
    %281 = vmatprep.subr.mxu0 0.0
    %282 = vmatpush1.xpose.msra.mxu0 0.0
    %283 = vmatprep.subr.mxu0 0.0
    %284 = vmatpush1.xpose.msra.mxu0 0.0
    %285 = vmatprep.subr.mxu0 0.0
    %286 = vmatpush1.xpose.msra.mxu0 0.0
    %287 = vmatprep.subr.mxu0 0.0
    %288 = vmatpush1.xpose.msra.mxu0 0.0
    %289 = vmatprep.subr.mxu0 0.0
    %290 = vmatpush1.xpose.msra.mxu0 0.0
    %291 = vmatprep.subr.mxu0 0.0
    %292 = vmatpush1.xpose.msra.mxu0 0.0
    %293 = vmatprep.subr.mxu0 0.0
    %294 = vmatpush1.xpose.msra.mxu0 0.0
    %295 = vmatprep.subr.mxu0 0.0
    %296 = vmatpush1.xpose.msra.mxu0 0.0
    %297 = vmatprep.subr.mxu0 0.0
    %298 = vmatpush1.xpose.msra.mxu0 0.0
    %299 = vmatprep.subr.mxu0 0.0
    %300 = vmatpush1.xpose.msra.mxu0 0.0
    %301 = vmatprep.subr.mxu0 0.0
    %302 = vmatpush1.xpose.msra.mxu0 0.0
    %303 = vmatprep.subr.mxu0 0.0
    %304 = vmatpush1.xpose.msra.mxu0 0.0
    %305 = vmatprep.subr.mxu0 0.0
    %306 = vmatpush1.xpose.msra.mxu0 0.0
    %307 = vmatprep.subr.mxu0 0.0
    %308 = vmatpush1.xpose.msra.mxu0 0.0
    %309 = vmatprep.subr.mxu0 0.0
    %310 = vmatpush1.xpose.msra.mxu0 0.0
    %311 = vmatprep.mubr.f32.mxu0 0.0
    %312 = vmatmul.mubr.f32.gmra.mrb[0].mxu0 %v243
    %v313 = vpop.f32.mrb[0].mxu0
    %v314 = vadd.f32 0.0, %v313
    %v315 = vpop.f32.mrb[0].mxu0
    %316 = vdwg.mxu0
    %v317 = vrot.slane %v54, 3
    %318 = vrot.lane.b32.xlu0 %v317, 112
    %v319 = vpop.permute.xlu0 %318
    %v320 = vsel %vm241, %v319, 0
    %322 = vmatprep.subr.mxu0 0.0
    %323 = vmatpush1.xpose.msra.mxu0 %v243
    %324 = vmatprep.subr.mxu0 0.0
    %325 = vmatpush1.xpose.msra.mxu0 0.0
    %326 = vmatprep.subr.mxu0 0.0
    %327 = vmatpush1.xpose.msra.mxu0 0.0
    %328 = vmatprep.subr.mxu0 0.0
    %329 = vmatpush1.xpose.msra.mxu0 0.0
    %330 = vmatprep.subr.mxu0 0.0
    %331 = vmatpush1.xpose.msra.mxu0 0.0
    %332 = vmatprep.subr.mxu0 0.0
    %333 = vmatpush1.xpose.msra.mxu0 0.0
    %334 = vmatprep.subr.mxu0 0.0
    %335 = vmatpush1.xpose.msra.mxu0 0.0
    %336 = vmatprep.subr.mxu0 0.0
    %337 = vmatpush1.xpose.msra.mxu0 0.0
    %338 = vmatprep.subr.mxu0 0.0
    %339 = vmatpush1.xpose.msra.mxu0 0.0
    %340 = vmatprep.subr.mxu0 0.0
    %341 = vmatpush1.xpose.msra.mxu0 0.0
    %342 = vmatprep.subr.mxu0 0.0
    %343 = vmatpush1.xpose.msra.mxu0 0.0
    %344 = vmatprep.subr.mxu0 0.0
    %345 = vmatpush1.xpose.msra.mxu0 0.0
    %346 = vmatprep.subr.mxu0 0.0
    %347 = vmatpush1.xpose.msra.mxu0 0.0
    %348 = vmatprep.subr.mxu0 0.0
    %349 = vmatpush1.xpose.msra.mxu0 0.0
    %350 = vmatprep.subr.mxu0 0.0
    %351 = vmatpush1.xpose.msra.mxu0 0.0
    %352 = vmatprep.subr.mxu0 0.0
    %353 = vmatpush1.xpose.msra.mxu0 0.0
    %354 = vmatprep.subr.mxu0 0.0
    %355 = vmatpush1.xpose.msra.mxu0 0.0
    %356 = vmatprep.subr.mxu0 0.0
    %357 = vmatpush1.xpose.msra.mxu0 0.0
    %358 = vmatprep.subr.mxu0 0.0
    %359 = vmatpush1.xpose.msra.mxu0 0.0
    %360 = vmatprep.subr.mxu0 0.0
    %361 = vmatpush1.xpose.msra.mxu0 0.0
    %362 = vmatprep.subr.mxu0 0.0
    %363 = vmatpush1.xpose.msra.mxu0 0.0
    %364 = vmatprep.subr.mxu0 0.0
    %365 = vmatpush1.xpose.msra.mxu0 0.0
    %366 = vmatprep.subr.mxu0 0.0
    %367 = vmatpush1.xpose.msra.mxu0 0.0
    %368 = vmatprep.subr.mxu0 0.0
    %369 = vmatpush1.xpose.msra.mxu0 0.0
    %370 = vmatprep.subr.mxu0 0.0
    %371 = vmatpush1.xpose.msra.mxu0 0.0
    %372 = vmatprep.subr.mxu0 0.0
    %373 = vmatpush1.xpose.msra.mxu0 0.0
    %374 = vmatprep.subr.mxu0 0.0
    %375 = vmatpush1.xpose.msra.mxu0 0.0
    %376 = vmatprep.subr.mxu0 0.0
    %377 = vmatpush1.xpose.msra.mxu0 0.0
    %378 = vmatprep.subr.mxu0 0.0
    %379 = vmatpush1.xpose.msra.mxu0 0.0
    %380 = vmatprep.subr.mxu0 0.0
    %381 = vmatpush1.xpose.msra.mxu0 0.0
    %382 = vmatprep.subr.mxu0 0.0
    %383 = vmatpush1.xpose.msra.mxu0 0.0
    %384 = vmatprep.subr.mxu0 0.0
    %385 = vmatpush1.xpose.msra.mxu0 0.0
    %386 = vmatprep.mubr.f32.mxu0 0.0
    %387 = vmatmul.mubr.f32.gmra.mrb[0].mxu0 %v320
    %v388 = vpop.f32.mrb[0].mxu0
    %v389 = vadd.f32 0.0, %v388
    %v390 = vpop.f32.mrb[0].mxu0
    %391 = vdwg.mxu0
    %393 = vset.pattern.permute.xlu0 0
    %394 = vperm.xlu0 %393, %v314
    %v395 = vpop.permute.xlu0 %394
    %v397 = vlaneseq
    %v398 = vshrl.u32 %v397, 7
    %v399 = vsub.s32 0, %v398
    %v400 = vrot.slane %v187, %v399
    %v401 = vmul.f32 %v395, %v400
    %402 = vset.pattern.permute.xlu0 1
    %403 = vperm.xlu0 %402, %v314
    %v404 = vpop.permute.xlu0 %403
    %v406 = vlaneseq
    %v407 = vshrl.u32 %v406, 7
    %v408 = vsub.s32 0, %v407
    %v409 = vrot.slane %v208, %v408
    %v410 = vmul.f32 %v404, %v409
    %v411 = vadd.f32 %v401, %v410
    %412 = vset.pattern.permute.xlu0 2
    %413 = vperm.xlu0 %412, %v314
    %v414 = vpop.permute.xlu0 %413
    %v416 = vlaneseq
    %v417 = vshrl.u32 %v416, 7
    %v418 = vsub.s32 0, %v417
    %v419 = vrot.slane %v229, %v418
    %v420 = vmul.f32 %v414, %v419
    %v421 = vadd.f32 %v411, %v420
    %v423 = vrot.slane %v421, 1
    %v425 = vmax.f32 %v421, %v423
    %v426 = vrot.slane %v421, 2
    %v428 = vmax.f32 %v425, %v426
    %v429 = vlaneseq
    %v430 = vshrl.u32 %v429, 7
    %v431 = vsub.s32 0, %v430
    %v432 = vrot.slane %v428, %v431
    %v433 = vsub.f32 %v421, %v432
    %v434 = vmul.f32 %v433, 1.442695
    %v435 = vpow.pop %v434
    %v437 = vrot.slane %v435, 1
    %v439 = vadd.f32 %v435, %v437
    %v440 = vrot.slane %v435, 2
    %v442 = vadd.f32 %v439, %v440
    %v443 = vrcp.pop %v442
    %v444 = vlaneseq
    %v445 = vshrl.u32 %v444, 7
    %v446 = vsub.s32 0, %v445
    %v447 = vrot.slane %v443, %v446
    %v448 = vmul.f32 %v435, %v447
    %450 = vset.pattern.permute.xlu0 0
    %451 = vperm.xlu0 %450, %v389
    %v452 = vpop.permute.xlu0 %451
    %v454 = vlaneseq
    %v455 = vshrl.u32 %v454, 7
    %v456 = vsub.s32 0, %v455
    %v457 = vrot.slane %v448, %v456
    %v458 = vmul.f32 %v452, %v457
    %459 = vset.pattern.permute.xlu0 1
    %460 = vperm.xlu0 %459, %v389
    %v461 = vpop.permute.xlu0 %460
    %v463 = vlaneseq
    %v464 = vshrl.u32 %v463, 7
    %v465 = vsub.s32 1, %v464
    %v466 = vrot.slane %v448, %v465
    %v467 = vmul.f32 %v461, %v466
    %v468 = vadd.f32 %v458, %v467
    %469 = vset.pattern.permute.xlu0 2
    %470 = vperm.xlu0 %469, %v389
    %v471 = vpop.permute.xlu0 %470
    %v473 = vlaneseq
    %v474 = vshrl.u32 %v473, 7
    %v475 = vsub.s32 2, %v474
    %v476 = vrot.slane %v448, %v475
    %v477 = vmul.f32 %v471, %v476
    %v478 = vadd.f32 %v468, %v477
    %v479 = vlaneseq
    %v480 = vshrl.u32 %v479, 7
    %v481 = vsub.s32 3, %v480
    %v482 = vrot.slane %v428, %v481
    %v483 = vsub.f32 %v421, %v482
    %v484 = vmul.f32 %v483, 1.442695
    %v485 = vpow.pop %v484
    %v487 = vrot.slane %v485, 1
    %v489 = vadd.f32 %v485, %v487
    %v490 = vrot.slane %v485, 2
    %v492 = vadd.f32 %v489, %v490
    %v493 = vrcp.pop %v492
    %v494 = vlaneseq
    %v495 = vshrl.u32 %v494, 7
    %v496 = vsub.s32 3, %v495
    %v497 = vrot.slane %v493, %v496
    %v498 = vmul.f32 %v485, %v497
    %499 = vset.pattern.permute.xlu0 3
    %500 = vperm.xlu0 %499, %v389
    %v501 = vpop.permute.xlu0 %500
    %v503 = vlaneseq
    %v504 = vshrl.u32 %v503, 7
    %v505 = vsub.s32 3, %v504
    %v506 = vrot.slane %v498, %v505
    %v507 = vmul.f32 %v501, %v506
    %508 = vset.pattern.permute.xlu0 4
    %509 = vperm.xlu0 %508, %v389
    %v510 = vpop.permute.xlu0 %509
    %v512 = vlaneseq
    %v513 = vshrl.u32 %v512, 7
    %v514 = vsub.s32 4, %v513
    %v515 = vrot.slane %v498, %v514
    %v516 = vmul.f32 %v510, %v515
    %v517 = vadd.f32 %v507, %v516
    %518 = vset.pattern.permute.xlu0 5
    %519 = vperm.xlu0 %518, %v389
    %v520 = vpop.permute.xlu0 %519
    %v522 = vlaneseq
    %v523 = vshrl.u32 %v522, 7
    %v524 = vsub.s32 5, %v523
    %v525 = vrot.slane %v498, %v524
    %v526 = vmul.f32 %v520, %v525
    %v527 = vadd.f32 %v517, %v526
    %v528 = vsel %vm237, %v478, %v527
    %v530 = vrot.slane %v498, 3
    %v532 = vsel %vm237, %v448, %v530
    %s533 = sld [smem:[#allocation8 + $0xc]]
    %v534 = vstv %s533
    %v535 = vmul.f32 %v534, %v528
    %s536 = sld [smem:[#allocation8 + $0xd]]
    %v537 = vstv %s536
    %v538 = vmul.f32 %v537, %v528
    %v540 = vrot.slane %v538, 1
    %v542 = vadd.f32 %v535, %v540
    %s543 = sld [smem:[#allocation8 + $0xe]]
    %v544 = vstv %s543
    %v545 = vmul.f32 %v544, %v528
    %v547 = vrot.slane %v545, 2
    %v549 = vadd.f32 %v542, %v547
    %s550 = sld [smem:[#allocation8 + $0x15]]
    %v551 = vstv %s550
    %v552 = vadd.f32 %v549, %v551
    %s553 = sld [smem:[#allocation8 + $0xf]]
    %v554 = vstv %s553
    %v555 = vmul.f32 %v554, %v528
    %s556 = sld [smem:[#allocation8 + $0x10]]
    %v557 = vstv %s556
    %v558 = vmul.f32 %v557, %v528
    %v560 = vrot.slane %v558, 1
    %v562 = vadd.f32 %v555, %v560
    %s563 = sld [smem:[#allocation8 + $0x11]]
    %v564 = vstv %s563
    %v565 = vmul.f32 %v564, %v528
    %v567 = vrot.slane %v565, 2
    %v569 = vadd.f32 %v562, %v567
    %s570 = sld [smem:[#allocation8 + $0x16]]
    %v571 = vstv %s570
    %v572 = vadd.f32 %v569, %v571
    %s573 = sld [smem:[#allocation8 + $0x12]]
    %v574 = vstv %s573
    %v575 = vmul.f32 %v574, %v528
    %s576 = sld [smem:[#allocation8 + $0x13]]
    %v577 = vstv %s576
    %v578 = vmul.f32 %v577, %v528
    %v580 = vrot.slane %v578, 1
    %v582 = vadd.f32 %v575, %v580
    %s583 = sld [smem:[#allocation8 + $0x14]]
    %v584 = vstv %s583
    %v585 = vmul.f32 %v584, %v528
    %v587 = vrot.slane %v585, 2
    %v589 = vadd.f32 %v582, %v587
    %s590 = sld [smem:[#allocation8 + $0x17]]
    %v591 = vstv %s590
    %v592 = vadd.f32 %v589, %v591
    %v594 = vrot.slane %v572, 7
    %v597 = vrot.slane %v592, 6
    %v600 = vrot.slane %v532, 5
    %vm602 = vcmask 1040384
    %v603 = vsel %vm602, %v552, %v594
    %vm604 = vcmask 1041408
    %v605 = vsel %vm604, %v603, %v597
    %v606 = vsel %vm235, %v605, %v600
    %vm607 = vcmask 128000
    %608 = vst.msk [vmem:[#allocation9] sm:$0x3f] %vm607, %v606
    // Predicated region
    $region26: #{tpu_custom_call.1} parent=1 // pred_check
      _
    $region27: #{tpu_custom_call.1} parent=1 // pred_check_branch
      %610 = sbr.rel (0) target = $region29
    $region28: #{tpu_custom_call.1} parent=1 // pred_region
      %s612 = ssub.s32 128, 128
      %613 = vsyncadd [#allocation4], %s612
      %s615 = sshll.u32 [#allocation9], 4
      %s616 = int_to_ptr.vmem [resolvable:$true] %s615
      %618 = dma.vmem_to_hbm [thread:$0]  %s616, 128, %s3, [#allocation4]
    $region29: #{tpu_custom_call.1} parent=1 // pred_fallthru
      _
    // Predicated region
    $region30: #{tpu_custom_call.1} parent=1 // pred_check
      _
    $region31: #{tpu_custom_call.1} parent=1 // pred_check_branch
      %620 = sbr.rel (0) target = $region33
    $region32: #{tpu_custom_call.1} parent=1 // pred_region
      %621 = dma.done [#allocation4], 128
    $region33: #{tpu_custom_call.1} parent=1 // pred_fallthru
      _
    %622 = vsyncpa [#allocation3], 1
    %623 = vsyncpa [#allocation7], 1
    %624 = vsyncpa [#allocation4], 1
    %625 = vsyncpa [#allocation5], 1

</llo_original>
